<compile_context>
chip_gen: v7x
topology: tpu7x:2x2x1
jax: 0.10.0
libtpu: 0.0.40
codegen_flags: <defaults>
</compile_context>

<pallas_src>
import jax
import jax.numpy as jnp
from jax.experimental import pallas as pl
from jax.experimental.pallas import tpu as pltpu


HIDDEN = 256
HEAD_PAD = 128      # 2 head columns padded to one lane-dense 128-wide slab
MAX_TILE_B = 1024   # rows per grid step (review: 1024-2048; clamped for tiny B)


def _round_up(x, m):
    return ((x + m - 1) // m) * m


def critic_kernel(x_ref, a_ref, w1x_ref, w1a_ref, b1_ref, w2_ref, b2_ref,
                  w3_ref, b3_ref, wq_ref, bq_ref, out_ref):
    """MLP forward for one batch tile.

    out_ref : (TILE_B, HEAD_PAD) f32. Column 0 = raw head output (mean),
              column 1 = softplus(raw) + 1e-6 (variance). Other lanes = pad.
    """
    cdt = w2_ref.dtype  # compute dtype of MXU operands (f32, or bf16 if prepped so)

    # fc1: concat fused as two matmuls (action scaling folded into w1a at prep).
    h = (jnp.dot(x_ref[...], w1x_ref[...], preferred_element_type=jnp.float32)
         + jnp.dot(a_ref[...], w1a_ref[...], preferred_element_type=jnp.float32)
         + b1_ref[...])
    h = jnp.maximum(h, 0.0)

    h = jnp.dot(h.astype(cdt), w2_ref[...],
                preferred_element_type=jnp.float32) + b2_ref[...]
    h = jnp.maximum(h, 0.0)

    h = jnp.dot(h.astype(cdt), w3_ref[...],
                preferred_element_type=jnp.float32) + b3_ref[...]
    h = jnp.maximum(h, 0.0)

    out = jnp.dot(h.astype(cdt), wq_ref[...],
                  preferred_element_type=jnp.float32) + bq_ref[...]

    # One-exp numerically stable softplus: max(o,0) + log1p(exp(-|o|)).
    sp = jnp.maximum(out, 0.0) + jnp.log1p(jnp.exp(-jnp.abs(out))) + 1e-6

    # Single fused output: lane 1 carries the variance, everything else raw.
    lane = jax.lax.broadcasted_iota(jnp.int32, out.shape, dimension=1)
    out_ref[...] = jnp.where(lane == 1, sp, out)


def prepare_params(params, x_dim, max_action=1.0, use_bf16=False):
    """One-time (outside the jitted forward) weight layout preparation.

    - splits fc1's weight into the x-slab and action-slab, folding 1/max_action
      into the action slab (so the kernel needs no scalar),
    - pads the 2-column head to a lane-dense 128-wide slab,
    - optionally casts matmul operands to bf16 (biases stay f32 for accuracy).
    """
    w1, b1, w2, b2, w3, b3, wq, bq = params
    w1 = jnp.asarray(w1, jnp.float32)
    w1x = w1[:x_dim, :]
    w1a = w1[x_dim:, :] / max_action

    wq_p = jnp.zeros((HIDDEN, HEAD_PAD), jnp.float32).at[:, :2].set(wq)
    bq_p = jnp.zeros((1, HEAD_PAD), jnp.float32).at[:, :2].set(bq)

    wdt = jnp.bfloat16 if use_bf16 else jnp.float32
    return (w1x.astype(wdt), w1a.astype(wdt), jnp.asarray(b1, jnp.float32),
            jnp.asarray(w2, wdt), jnp.asarray(b2, jnp.float32),
            jnp.asarray(w3, wdt), jnp.asarray(b3, jnp.float32),
            wq_p.astype(wdt), bq_p)


@jax.jit
def gaussian_critic_forward(x, actions, prepared_params):
    """Equivalent of OLDGaussianCritic.forward(x, actions) -> (mean, variance)."""
    w1x, w1a, b1, w2, b2, w3, b3, wq_p, bq_p = prepared_params
    wdt = w2.dtype

    B, dx = x.shape
    da = actions.shape[1]

    tile_b = min(MAX_TILE_B, _round_up(B, 8))
    Bp = _round_up(B, tile_b)

    # Only row padding (tiny); no 128-wide concat tensor is materialized.
    x_p = jnp.zeros((Bp, dx), wdt).at[:B].set(x.astype(wdt))
    a_p = jnp.zeros((Bp, da), wdt).at[:B].set(actions.astype(wdt))

    def resident(arr):
        # Weights/biases: same block every grid step -> stay VMEM-resident.
        return pl.BlockSpec(arr.shape, lambda i: (0,) * arr.ndim)

    out = pl.pallas_call(
        critic_kernel,
        out_shape=jax.ShapeDtypeStruct((Bp, HEAD_PAD), jnp.float32),
        grid=(Bp // tile_b,),
        in_specs=[
            pl.BlockSpec((tile_b, dx), lambda i: (i, 0)),
            pl.BlockSpec((tile_b, da), lambda i: (i, 0)),
            resident(w1x), resident(w1a), resident(b1),
            resident(w2), resident(b2),
            resident(w3), resident(b3),
            resident(wq_p), resident(bq_p),
        ],
        out_specs=pl.BlockSpec((tile_b, HEAD_PAD), lambda i: (i, 0)),
        compiler_params=pltpu.CompilerParams(
            dimension_semantics=("parallel",)),
    )(x_p, a_p, w1x, w1a, b1, w2, b2, w3, b3, wq_p, bq_p)

    mean = out[:B, 0:1]        # torch.split(x, 1, dim=1)[0]
    variance = out[:B, 1:2]    # softplus(split[1]) + 1e-6 (done in-kernel)
    return mean, variance


def init_params(key, in_dim):
    """Deterministic synthetic parameters (nn.Linear shapes, stored transposed)."""
    ks = jax.random.split(key, 8)
    scale = 0.1

    def lin(kw, kb, fan_in, fan_out):
        w = scale * jax.random.normal(kw, (fan_in, fan_out), jnp.float32)
        b = scale * jax.random.normal(kb, (1, fan_out), jnp.float32)
        return w, b

    w1, b1 = lin(ks[0], ks[1], in_dim, HIDDEN)
    w2, b2 = lin(ks[2], ks[3], HIDDEN, HIDDEN)
    w3, b3 = lin(ks[4], ks[5], HIDDEN, HIDDEN)
    wq, bq = lin(ks[6], ks[7], HIDDEN, 2)
    return (w1, b1, w2, b2, w3, b3, wq, bq)


def reference_forward(x, actions, params, max_action=1.0):
    w1, b1, w2, b2, w3, b3, wq, bq = params
    h = jnp.concatenate([x, actions / max_action], axis=1)
    h = jax.nn.relu(h @ w1 + b1)
    h = jax.nn.relu(h @ w2 + b2)
    h = jax.nn.relu(h @ w3 + b3)
    out = h @ wq + bq
    mean = out[:, 0:1]
    variance = jax.nn.softplus(out[:, 1:2]) + 1e-6
    return mean, variance


if __name__ == "__main__":
    # Small shapes consistent with the module: obs_dim=10, goal_dim=3, action_dim=4.
    obs_dim, goal_dim, action_dim = 10, 3, 4
    batch = 2
    max_action = 1.0
    x_dim = obs_dim + goal_dim
    in_dim = x_dim + action_dim

    key = jax.random.PRNGKey(0)
    kx, ka, kp = jax.random.split(key, 3)
    x = jax.random.normal(kx, (batch, x_dim), jnp.float32)
    actions = jax.random.normal(ka, (batch, action_dim), jnp.float32)
    params = init_params(kp, in_dim)

    # Weight prep (split/pad/scale-fold) happens once, outside the jitted forward.
    prepared = prepare_params(params, x_dim, max_action=max_action, use_bf16=False)

    mean, variance = gaussian_critic_forward(x, actions, prepared)
    mean = jax.block_until_ready(mean)
    variance = jax.block_until_ready(variance)

    ref_mean, ref_var = reference_forward(x, actions, params, max_action)
    assert mean.shape == (batch, 1) and variance.shape == (batch, 1)
    assert jnp.allclose(mean, ref_mean, atol=1e-4), "mean mismatch"
    assert jnp.allclose(variance, ref_var, atol=1e-4), "variance mismatch"

    print("KERNEL_OK")
</pallas_src>

<mosaic_0001>
module attributes {stable_mosaic.version = 11 : i64} {
  func.func @critic_kernel(%arg0: i32, %arg1: memref<8x13xf32, #tpu.memory_space<vmem>>, %arg2: memref<8x4xf32, #tpu.memory_space<vmem>>, %arg3: memref<13x256xf32, #tpu.memory_space<vmem>>, %arg4: memref<4x256xf32, #tpu.memory_space<vmem>>, %arg5: memref<1x256xf32, #tpu.memory_space<vmem>>, %arg6: memref<256x256xf32, #tpu.memory_space<vmem>>, %arg7: memref<1x256xf32, #tpu.memory_space<vmem>>, %arg8: memref<256x256xf32, #tpu.memory_space<vmem>>, %arg9: memref<1x256xf32, #tpu.memory_space<vmem>>, %arg10: memref<256x128xf32, #tpu.memory_space<vmem>>, %arg11: memref<1x128xf32, #tpu.memory_space<vmem>>, %arg12: memref<8x128xf32, #tpu.memory_space<vmem>>) attributes {dimension_semantics = [#tpu.dimension_semantics<parallel>], iteration_bounds = array<i64: 1>, scalar_prefetch = 0 : i64, scratch_operands = 0 : i64, tpu.core_type = #tpu.core_type<tc>, window_params = [{transform_indices = @transform_0, window_bounds = array<i64: 8, 13>}, {transform_indices = @transform_1, window_bounds = array<i64: 8, 4>}, {pipeline_mode = #tpu.pipeline_mode<synchronous>, transform_indices = @transform_2, window_bounds = array<i64: 13, 256>}, {pipeline_mode = #tpu.pipeline_mode<synchronous>, transform_indices = @transform_3, window_bounds = array<i64: 4, 256>}, {pipeline_mode = #tpu.pipeline_mode<synchronous>, transform_indices = @transform_4, window_bounds = array<i64: 1, 256>}, {pipeline_mode = #tpu.pipeline_mode<synchronous>, transform_indices = @transform_5, window_bounds = array<i64: 256, 256>}, {pipeline_mode = #tpu.pipeline_mode<synchronous>, transform_indices = @transform_6, window_bounds = array<i64: 1, 256>}, {pipeline_mode = #tpu.pipeline_mode<synchronous>, transform_indices = @transform_7, window_bounds = array<i64: 256, 256>}, {pipeline_mode = #tpu.pipeline_mode<synchronous>, transform_indices = @transform_8, window_bounds = array<i64: 1, 256>}, {pipeline_mode = #tpu.pipeline_mode<synchronous>, transform_indices = @transform_9, window_bounds = array<i64: 256, 128>}, {pipeline_mode = #tpu.pipeline_mode<synchronous>, transform_indices = @transform_10, window_bounds = array<i64: 1, 128>}, {transform_indices = @transform_11, window_bounds = array<i64: 8, 128>}]} {
    %c0 = arith.constant 0 : index
    %c0_0 = arith.constant 0 : index
    %0 = vector.load %arg1[%c0, %c0_0] : memref<8x13xf32, #tpu.memory_space<vmem>>, vector<8x13xf32>
    %c0_1 = arith.constant 0 : index
    %c0_2 = arith.constant 0 : index
    %1 = vector.load %arg3[%c0_1, %c0_2] : memref<13x256xf32, #tpu.memory_space<vmem>>, vector<13x256xf32>
    %cst = arith.constant dense<0.000000e+00> : vector<8x256xf32>
    %2 = tpu.matmul %0, %1, %cst {dimension_numbers = #tpu.dot_dimension_numbers<[1], [0], [0], [1], [0, 0, 1, 1], [], []>} : vector<8x13xf32>, vector<13x256xf32>, vector<8x256xf32> -> vector<8x256xf32>
    %c0_3 = arith.constant 0 : index
    %c0_4 = arith.constant 0 : index
    %3 = vector.load %arg2[%c0_3, %c0_4] : memref<8x4xf32, #tpu.memory_space<vmem>>, vector<8x4xf32>
    %c0_5 = arith.constant 0 : index
    %c0_6 = arith.constant 0 : index
    %4 = vector.load %arg4[%c0_5, %c0_6] : memref<4x256xf32, #tpu.memory_space<vmem>>, vector<4x256xf32>
    %cst_7 = arith.constant dense<0.000000e+00> : vector<8x256xf32>
    %5 = tpu.matmul %3, %4, %cst_7 {dimension_numbers = #tpu.dot_dimension_numbers<[1], [0], [0], [1], [0, 0, 1, 1], [], []>} : vector<8x4xf32>, vector<4x256xf32>, vector<8x256xf32> -> vector<8x256xf32>
    %6 = arith.addf %2, %5 : vector<8x256xf32>
    %c0_8 = arith.constant 0 : index
    %c0_9 = arith.constant 0 : index
    %7 = vector.load %arg5[%c0_8, %c0_9] : memref<1x256xf32, #tpu.memory_space<vmem>>, vector<1x256xf32>
    %8 = vector.broadcast %7 : vector<1x256xf32> to vector<8x256xf32>
    %9 = arith.addf %6, %8 : vector<8x256xf32>
    %cst_10 = arith.constant 0.000000e+00 : f32
    %10 = vector.broadcast %cst_10 : f32 to vector<8x256xf32>
    %11 = arith.maximumf %9, %10 : vector<8x256xf32>
    %c0_11 = arith.constant 0 : index
    %c0_12 = arith.constant 0 : index
    %12 = vector.load %arg6[%c0_11, %c0_12] : memref<256x256xf32, #tpu.memory_space<vmem>>, vector<256x256xf32>
    %cst_13 = arith.constant dense<0.000000e+00> : vector<8x256xf32>
    %13 = tpu.matmul %11, %12, %cst_13 {dimension_numbers = #tpu.dot_dimension_numbers<[1], [0], [0], [1], [0, 0, 1, 1], [], []>} : vector<8x256xf32>, vector<256x256xf32>, vector<8x256xf32> -> vector<8x256xf32>
    %c0_14 = arith.constant 0 : index
    %c0_15 = arith.constant 0 : index
    %14 = vector.load %arg7[%c0_14, %c0_15] : memref<1x256xf32, #tpu.memory_space<vmem>>, vector<1x256xf32>
    %15 = vector.broadcast %14 : vector<1x256xf32> to vector<8x256xf32>
    %16 = arith.addf %13, %15 : vector<8x256xf32>
    %cst_16 = arith.constant 0.000000e+00 : f32
    %17 = vector.broadcast %cst_16 : f32 to vector<8x256xf32>
    %18 = arith.maximumf %16, %17 : vector<8x256xf32>
    %c0_17 = arith.constant 0 : index
    %c0_18 = arith.constant 0 : index
    %19 = vector.load %arg8[%c0_17, %c0_18] : memref<256x256xf32, #tpu.memory_space<vmem>>, vector<256x256xf32>
    %cst_19 = arith.constant dense<0.000000e+00> : vector<8x256xf32>
    %20 = tpu.matmul %18, %19, %cst_19 {dimension_numbers = #tpu.dot_dimension_numbers<[1], [0], [0], [1], [0, 0, 1, 1], [], []>} : vector<8x256xf32>, vector<256x256xf32>, vector<8x256xf32> -> vector<8x256xf32>
    %c0_20 = arith.constant 0 : index
    %c0_21 = arith.constant 0 : index
    %21 = vector.load %arg9[%c0_20, %c0_21] : memref<1x256xf32, #tpu.memory_space<vmem>>, vector<1x256xf32>
    %22 = vector.broadcast %21 : vector<1x256xf32> to vector<8x256xf32>
    %23 = arith.addf %20, %22 : vector<8x256xf32>
    %cst_22 = arith.constant 0.000000e+00 : f32
    %24 = vector.broadcast %cst_22 : f32 to vector<8x256xf32>
    %25 = arith.maximumf %23, %24 : vector<8x256xf32>
    %c0_23 = arith.constant 0 : index
    %c0_24 = arith.constant 0 : index
    %26 = vector.load %arg10[%c0_23, %c0_24] : memref<256x128xf32, #tpu.memory_space<vmem>>, vector<256x128xf32>
    %cst_25 = arith.constant dense<0.000000e+00> : vector<8x128xf32>
    %27 = tpu.matmul %25, %26, %cst_25 {dimension_numbers = #tpu.dot_dimension_numbers<[1], [0], [0], [1], [0, 0, 1, 1], [], []>} : vector<8x256xf32>, vector<256x128xf32>, vector<8x128xf32> -> vector<8x128xf32>
    %c0_26 = arith.constant 0 : index
    %c0_27 = arith.constant 0 : index
    %28 = vector.load %arg11[%c0_26, %c0_27] : memref<1x128xf32, #tpu.memory_space<vmem>>, vector<1x128xf32>
    %29 = vector.broadcast %28 : vector<1x128xf32> to vector<8x128xf32>
    %30 = arith.addf %27, %29 : vector<8x128xf32>
    %cst_28 = arith.constant 0.000000e+00 : f32
    %31 = vector.broadcast %cst_28 : f32 to vector<8x128xf32>
    %32 = arith.maximumf %30, %31 : vector<8x128xf32>
    %33 = math.absf %30 : vector<8x128xf32>
    %cst_29 = arith.constant 0.000000e+00 : f32
    %34 = vector.broadcast %cst_29 : f32 to vector<8x128xf32>
    %35 = arith.subf %34, %33 : vector<8x128xf32>
    %36 = math.exp %35 : vector<8x128xf32>
    %37 = math.log1p %36 : vector<8x128xf32>
    %38 = arith.addf %32, %37 : vector<8x128xf32>
    %cst_30 = arith.constant 9.99999997E-7 : f32
    %39 = vector.broadcast %cst_30 : f32 to vector<8x128xf32>
    %40 = arith.addf %38, %39 : vector<8x128xf32>
    %41 = tpu.iota {dimensions = array<i32: 1>} : vector<8x128xi32>
    %c1_i32 = arith.constant 1 : i32
    %42 = vector.broadcast %c1_i32 : i32 to vector<8x128xi32>
    %43 = arith.cmpi eq, %41, %42 : vector<8x128xi32>
    %44 = arith.select %43, %40, %30 : vector<8x128xi1>, vector<8x128xf32>
    %c0_31 = arith.constant 0 : index
    %c0_32 = arith.constant 0 : index
    %45 = vector.load %arg12[%c0_31, %c0_32] : memref<8x128xf32, #tpu.memory_space<vmem>>, vector<8x128xf32>
    tpu.vector_store %arg12[%c0_31, %c0_32], %44 {strides = array<i32>} : memref<8x128xf32, #tpu.memory_space<vmem>>, vector<8x128xf32>,
    return
  }
  func.func @transform_0(%arg0: i32) -> (i32, i32) {
    %c0_i32 = arith.constant 0 : i32
    %c0_i32_0 = arith.constant 0 : i32
    return %arg0, %c0_i32 : i32, i32
  }
  func.func @transform_1(%arg0: i32) -> (i32, i32) {
    %c0_i32 = arith.constant 0 : i32
    %c0_i32_0 = arith.constant 0 : i32
    return %arg0, %c0_i32 : i32, i32
  }
  func.func @transform_2(%arg0: i32) -> (i32, i32) {
    %c0_i32 = arith.constant 0 : i32
    %c0_i32_0 = arith.constant 0 : i32
    %c0_i32_1 = arith.constant 0 : i32
    return %c0_i32, %c0_i32_0 : i32, i32
  }
  func.func @transform_3(%arg0: i32) -> (i32, i32) {
    %c0_i32 = arith.constant 0 : i32
    %c0_i32_0 = arith.constant 0 : i32
    %c0_i32_1 = arith.constant 0 : i32
    return %c0_i32, %c0_i32_0 : i32, i32
  }
  func.func @transform_4(%arg0: i32) -> (i32, i32) {
    %c0_i32 = arith.constant 0 : i32
    %c0_i32_0 = arith.constant 0 : i32
    %c0_i32_1 = arith.constant 0 : i32
    return %c0_i32, %c0_i32_0 : i32, i32
  }
  func.func @transform_5(%arg0: i32) -> (i32, i32) {
    %c0_i32 = arith.constant 0 : i32
    %c0_i32_0 = arith.constant 0 : i32
    %c0_i32_1 = arith.constant 0 : i32
    return %c0_i32, %c0_i32_0 : i32, i32
  }
  func.func @transform_6(%arg0: i32) -> (i32, i32) {
    %c0_i32 = arith.constant 0 : i32
    %c0_i32_0 = arith.constant 0 : i32
    %c0_i32_1 = arith.constant 0 : i32
    return %c0_i32, %c0_i32_0 : i32, i32
  }
  func.func @transform_7(%arg0: i32) -> (i32, i32) {
    %c0_i32 = arith.constant 0 : i32
    %c0_i32_0 = arith.constant 0 : i32
    %c0_i32_1 = arith.constant 0 : i32
    return %c0_i32, %c0_i32_0 : i32, i32
  }
  func.func @transform_8(%arg0: i32) -> (i32, i32) {
    %c0_i32 = arith.constant 0 : i32
    %c0_i32_0 = arith.constant 0 : i32
    %c0_i32_1 = arith.constant 0 : i32
    return %c0_i32, %c0_i32_0 : i32, i32
  }
  func.func @transform_9(%arg0: i32) -> (i32, i32) {
    %c0_i32 = arith.constant 0 : i32
    %c0_i32_0 = arith.constant 0 : i32
    %c0_i32_1 = arith.constant 0 : i32
    return %c0_i32, %c0_i32_0 : i32, i32
  }
  func.func @transform_10(%arg0: i32) -> (i32, i32) {
    %c0_i32 = arith.constant 0 : i32
    %c0_i32_0 = arith.constant 0 : i32
    %c0_i32_1 = arith.constant 0 : i32
    return %c0_i32, %c0_i32_0 : i32, i32
  }
  func.func @transform_11(%arg0: i32) -> (i32, i32) {
    %c0_i32 = arith.constant 0 : i32
    %c0_i32_0 = arith.constant 0 : i32
    return %arg0, %c0_i32 : i32, i32
  }
}

</mosaic_0001>

<llo_original>
// kernel: gaussian_critic_forward.1
$region0: #{gaussian_critic_forward.1}
  #allocation0 [shape = 'u32[]', space=smem, size = 0x4, offset = 0x4, fixed_abs, tag = 'smem constant byte address 0x4 - core index']
  #allocation1 [shape = 'u32[144,128]{1,0:T(1,128)}', space=vmem, size = 0x12000, scoped, tag = 'internal scratch']
  %s0 = inlined_call_operand.vmem [shape: f32[8,13], index: 0, kind: input, shape index: {}]
  %s1 = inlined_call_operand.vmem [shape: f32[8,4], index: 1, kind: input, shape index: {}]
  %s2 = inlined_call_operand.hbm [shape: f32[13,256], index: 2, kind: input, shape index: {}]
  %s3 = inlined_call_operand.vmem [shape: f32[4,256], index: 3, kind: input, shape index: {}]
  %s4 = inlined_call_operand.vmem [shape: f32[1,256], index: 4, kind: input, shape index: {}]
  %s5 = inlined_call_operand.hbm [shape: f32[256,256], index: 5, kind: input, shape index: {}]
  %s6 = inlined_call_operand.vmem [shape: f32[1,256], index: 6, kind: input, shape index: {}]
  %s7 = inlined_call_operand.hbm [shape: f32[256,256], index: 7, kind: input, shape index: {}]
  %s8 = inlined_call_operand.vmem [shape: f32[1,256], index: 8, kind: input, shape index: {}]
  %s9 = inlined_call_operand.hbm [shape: f32[256,128], index: 9, kind: input, shape index: {}]
  %s10 = inlined_call_operand.vmem [shape: f32[1,128], index: 10, kind: input, shape index: {}]
  %s11 = inlined_call_operand.vmem [shape: f32[8,128], index: 11, kind: output, shape index: {}]
  %s12 = sld [smem:[#allocation0]]
  $region70: #{gaussian_critic_forward.1} parent=0
    _
  %s14 = ssub.s32 1, %s12
  %s15 = scalar_select 0, %s14, %s12
  $region1: #{gaussian_critic_forward.1} parent=0
    #allocation2 [shape = 'u8[16384]{0}', space=vmem, size = 0x4000, scoped, tag = 'input window, operand 2, single buffered']
    #allocation3 [shape = 's32[1]{0}', space=sflag, size = 0x4, scoped, tag = 'scoped memory for gaussian_critic_forward.1']
    #allocation4 [shape = 'u8[262144]{0}', space=vmem, size = 0x40000, scoped, tag = 'input window, operand 5, single buffered']
    #allocation5 [shape = 's32[1]{0}', space=sflag, size = 0x4, scoped, tag = 'scoped memory for gaussian_critic_forward.1']
    #allocation6 [shape = 'u8[262144]{0}', space=vmem, size = 0x40000, scoped, tag = 'input window, operand 7, single buffered']
    #allocation7 [shape = 'u8[131072]{0}', space=vmem, size = 0x20000, scoped, tag = 'input window, operand 9, single buffered']
    #allocation8 [shape = 's32[1]{0}', space=sflag, size = 0x4, scoped, tag = 'scoped memory for gaussian_critic_forward.1']
    %16 = vsyncpa [#allocation3], 0
    %17 = vsyncpa [#allocation5], 0
    %18 = vsyncpa [#allocation8], 0
    // Predicated region
    $region2: #{gaussian_critic_forward.1} parent=1 // pred_check
      _
    $region3: #{gaussian_critic_forward.1} parent=1 // pred_check_branch
      %20 = sbr.rel (0) target = $region5
    $region4: #{gaussian_critic_forward.1} parent=1 // pred_region
      _
    $region5: #{gaussian_critic_forward.1} parent=1 // pred_fallthru
      _
    // Predicated region
    $region6: #{gaussian_critic_forward.1} parent=1 // pred_check
      _
    $region7: #{gaussian_critic_forward.1} parent=1 // pred_check_branch
      %22 = sbr.rel (0) target = $region9
    $region8: #{gaussian_critic_forward.1} parent=1 // pred_region
      _
    $region9: #{gaussian_critic_forward.1} parent=1 // pred_fallthru
      _
    // Predicated region
    $region10: #{gaussian_critic_forward.1} parent=1 // pred_check
      _
    $region11: #{gaussian_critic_forward.1} parent=1 // pred_check_branch
      %24 = sbr.rel (0) target = $region13
    $region12: #{gaussian_critic_forward.1} parent=1 // pred_region
      %s26 = ssub.s32 512, 512
      %27 = vsyncadd [#allocation3], %s26
      %s28 = sshll.u32 [#allocation2], 4
      %s29 = int_to_ptr.vmem [resolvable:$true] %s28
      %34 = dma.hbm_to_vmem [thread:$0]  %s2, 512, %s29, [#allocation3], 256, 256, 16
    $region13: #{gaussian_critic_forward.1} parent=1 // pred_fallthru
      _
    // Predicated region
    $region14: #{gaussian_critic_forward.1} parent=1 // pred_check
      _
    $region15: #{gaussian_critic_forward.1} parent=1 // pred_check_branch
      %36 = sbr.rel (0) target = $region17
    $region16: #{gaussian_critic_forward.1} parent=1 // pred_region
      _
    $region17: #{gaussian_critic_forward.1} parent=1 // pred_fallthru
      _
    // Predicated region
    $region18: #{gaussian_critic_forward.1} parent=1 // pred_check
      _
    $region19: #{gaussian_critic_forward.1} parent=1 // pred_check_branch
      %38 = sbr.rel (0) target = $region21
    $region20: #{gaussian_critic_forward.1} parent=1 // pred_region
      _
    $region21: #{gaussian_critic_forward.1} parent=1 // pred_fallthru
      _
    // Predicated region
    $region22: #{gaussian_critic_forward.1} parent=1 // pred_check
      _
    $region23: #{gaussian_critic_forward.1} parent=1 // pred_check_branch
      %40 = sbr.rel (0) target = $region25
    $region24: #{gaussian_critic_forward.1} parent=1 // pred_region
      %s42 = ssub.s32 8192, 8192
      %43 = vsyncadd [#allocation5], %s42
      %s44 = sshll.u32 [#allocation4], 4
      %s45 = int_to_ptr.vmem [resolvable:$true] %s44
      %50 = dma.hbm_to_vmem [thread:$0]  %s5, 8192, %s45, [#allocation5], 256, 256, 16
    $region25: #{gaussian_critic_forward.1} parent=1 // pred_fallthru
      _
    // Predicated region
    $region26: #{gaussian_critic_forward.1} parent=1 // pred_check
      _
    $region27: #{gaussian_critic_forward.1} parent=1 // pred_check_branch
      %52 = sbr.rel (0) target = $region29
    $region28: #{gaussian_critic_forward.1} parent=1 // pred_region
      _
    $region29: #{gaussian_critic_forward.1} parent=1 // pred_fallthru
      _
    // Predicated region
    $region30: #{gaussian_critic_forward.1} parent=1 // pred_check
      _
    $region31: #{gaussian_critic_forward.1} parent=1 // pred_check_branch
      %54 = sbr.rel (0) target = $region33
    $region32: #{gaussian_critic_forward.1} parent=1 // pred_region
      %s56 = ssub.s32 8192, 8192
      %57 = vsyncadd [#allocation5], %s56
      %s58 = sshll.u32 [#allocation6], 4
      %s59 = int_to_ptr.vmem [resolvable:$true] %s58
      %64 = dma.hbm_to_vmem [thread:$0]  %s7, 8192, %s59, [#allocation5], 256, 256, 16
    $region33: #{gaussian_critic_forward.1} parent=1 // pred_fallthru
      _
    // Predicated region
    $region34: #{gaussian_critic_forward.1} parent=1 // pred_check
      _
    $region35: #{gaussian_critic_forward.1} parent=1 // pred_check_branch
      %66 = sbr.rel (0) target = $region37
    $region36: #{gaussian_critic_forward.1} parent=1 // pred_region
      _
    $region37: #{gaussian_critic_forward.1} parent=1 // pred_fallthru
      _
    // Predicated region
    $region38: #{gaussian_critic_forward.1} parent=1 // pred_check
      _
    $region39: #{gaussian_critic_forward.1} parent=1 // pred_check_branch
      %68 = sbr.rel (0) target = $region41
    $region40: #{gaussian_critic_forward.1} parent=1 // pred_region
      %s70 = ssub.s32 4096, 4096
      %71 = vsyncadd [#allocation8], %s70
      %s72 = sshll.u32 [#allocation7], 4
      %s73 = int_to_ptr.vmem [resolvable:$true] %s72
      %78 = dma.hbm_to_vmem [thread:$0]  %s9, 4096, %s73, [#allocation8], 128, 128, 8
    $region41: #{gaussian_critic_forward.1} parent=1 // pred_fallthru
      _
    // Predicated region
    $region42: #{gaussian_critic_forward.1} parent=1 // pred_check
      _
    $region43: #{gaussian_critic_forward.1} parent=1 // pred_check_branch
      %80 = sbr.rel (0) target = $region45
    $region44: #{gaussian_critic_forward.1} parent=1 // pred_region
      _
    $region45: #{gaussian_critic_forward.1} parent=1 // pred_fallthru
      _
    // Predicated region
    $region46: #{gaussian_critic_forward.1} parent=1 // pred_check
      _
    $region47: #{gaussian_critic_forward.1} parent=1 // pred_check_branch
      %82 = sbr.rel (0) target = $region49
    $region48: #{gaussian_critic_forward.1} parent=1 // pred_region
      %83 = dma.done [#allocation3], 512
    $region49: #{gaussian_critic_forward.1} parent=1 // pred_fallthru
      _
    // Predicated region
    $region50: #{gaussian_critic_forward.1} parent=1 // pred_check
      _
    $region51: #{gaussian_critic_forward.1} parent=1 // pred_check_branch
      %85 = sbr.rel (0) target = $region53
    $region52: #{gaussian_critic_forward.1} parent=1 // pred_region
      %86 = dma.done [#allocation5], 8192
    $region53: #{gaussian_critic_forward.1} parent=1 // pred_fallthru
      _
    // Predicated region
    $region54: #{gaussian_critic_forward.1} parent=1 // pred_check
      _
    $region55: #{gaussian_critic_forward.1} parent=1 // pred_check_branch
      %88 = sbr.rel (0) target = $region57
    $region56: #{gaussian_critic_forward.1} parent=1 // pred_region
      %89 = dma.done [#allocation5], 8192
    $region57: #{gaussian_critic_forward.1} parent=1 // pred_fallthru
      _
    // Predicated region
    $region58: #{gaussian_critic_forward.1} parent=1 // pred_check
      _
    $region59: #{gaussian_critic_forward.1} parent=1 // pred_check_branch
      %91 = sbr.rel (0) target = $region61
    $region60: #{gaussian_critic_forward.1} parent=1 // pred_region
      %92 = dma.done [#allocation8], 4096
    $region61: #{gaussian_critic_forward.1} parent=1 // pred_fallthru
      _
    %v93 = vld [vmem:[%s0] sm:$0xff]
    %v94 = vld [vmem:[#allocation2] sm:$0xff]
    %v95 = vld [vmem:[#allocation2 + $0x8] sm:$0xff]
    %v96 = vld [vmem:[#allocation2 + $0x10] sm:$0x1f]
    %v97 = vld [vmem:[#allocation2 + $0x18] sm:$0x1f]
    %v98 = vld [vmem:[%s1] sm:$0xff]
    %v99 = vld [vmem:[%s3] sm:$0xff]
    %v101 = vcombine.high %v99, %v99
    %vm102 = vcmask 31744
    %v104 = vsel %vm102, %v98, 0
    %vm106 = vcmask 1043456
    %v107 = vsel %vm106, %v99, 0
    %v109 = vsel %vm106, %v101, 0
    %111 = vmatprep.subr.mxu0 %v109
    %112 = vmatpush1.msra.mxu0 %v107
    %113 = vmatprep.subr.mxu0 0.0
    %114 = vmatpush1.msra.mxu0 0.0
    %115 = vmatprep.subr.mxu0 0.0
    %116 = vmatpush1.msra.mxu0 0.0
    %117 = vmatprep.subr.mxu0 0.0
    %118 = vmatpush1.msra.mxu0 0.0
    %119 = vmatprep.subr.mxu0 0.0
    %120 = vmatpush1.msra.mxu0 0.0
    %121 = vmatprep.subr.mxu0 0.0
    %122 = vmatpush1.msra.mxu0 0.0
    %123 = vmatprep.subr.mxu0 0.0
    %124 = vmatpush1.msra.mxu0 0.0
    %125 = vmatprep.subr.mxu0 0.0
    %126 = vmatpush1.msra.mxu0 0.0
    %127 = vmatprep.subr.mxu0 0.0
    %128 = vmatpush1.msra.mxu0 0.0
    %129 = vmatprep.subr.mxu0 0.0
    %130 = vmatpush1.msra.mxu0 0.0
    %131 = vmatprep.subr.mxu0 0.0
    %132 = vmatpush1.msra.mxu0 0.0
    %133 = vmatprep.subr.mxu0 0.0
    %134 = vmatpush1.msra.mxu0 0.0
    %135 = vmatprep.subr.mxu0 0.0
    %136 = vmatpush1.msra.mxu0 0.0
    %137 = vmatprep.subr.mxu0 0.0
    %138 = vmatpush1.msra.mxu0 0.0
    %139 = vmatprep.subr.mxu0 0.0
    %140 = vmatpush1.msra.mxu0 0.0
    %141 = vmatprep.subr.mxu0 0.0
    %142 = vmatpush1.msra.mxu0 0.0
    %143 = vmatprep.subr.mxu0 0.0
    %144 = vmatpush1.msra.mxu0 0.0
    %145 = vmatprep.subr.mxu0 0.0
    %146 = vmatpush1.msra.mxu0 0.0
    %147 = vmatprep.subr.mxu0 0.0
    %148 = vmatpush1.msra.mxu0 0.0
    %149 = vmatprep.subr.mxu0 0.0
    %150 = vmatpush1.msra.mxu0 0.0
    %151 = vmatprep.subr.mxu0 0.0
    %152 = vmatpush1.msra.mxu0 0.0
    %153 = vmatprep.subr.mxu0 0.0
    %154 = vmatpush1.msra.mxu0 0.0
    %155 = vmatprep.subr.mxu0 0.0
    %156 = vmatpush1.msra.mxu0 0.0
    %157 = vmatprep.subr.mxu0 0.0
    %158 = vmatpush1.msra.mxu0 0.0
    %159 = vmatprep.subr.mxu0 0.0
    %160 = vmatpush1.msra.mxu0 0.0
    %161 = vmatprep.subr.mxu0 0.0
    %162 = vmatpush1.msra.mxu0 0.0
    %163 = vmatprep.subr.mxu0 0.0
    %164 = vmatpush1.msra.mxu0 0.0
    %165 = vmatprep.subr.mxu0 0.0
    %166 = vmatpush1.msra.mxu0 0.0
    %167 = vmatprep.subr.mxu0 0.0
    %168 = vmatpush1.msra.mxu0 0.0
    %169 = vmatprep.subr.mxu0 0.0
    %170 = vmatpush1.msra.mxu0 0.0
    %171 = vmatprep.subr.mxu0 0.0
    %172 = vmatpush1.msra.mxu0 0.0
    %173 = vmatprep.subr.mxu0 0.0
    %174 = vmatpush1.msra.mxu0 0.0
    %175 = vmatprep.mubr.f32.mxu0 0.0
    %176 = vmatmul.mubr.f32.gmra.mrb[0].mxu0 %v104
    %v177 = vpop.f32.mrb[0].mxu0
    %v178 = vadd.f32 0.0, %v177
    %v179 = vpop.f32.mrb[0].mxu0
    %v180 = vadd.f32 0.0, %v179
    %181 = vdwg.mxu0
    %vm182 = vcmask 105472
    %v184 = vsel %vm182, %v93, 0
    %vm186 = vcmask 1044480
    %v188 = vsel %vm186, %v96, 0
    %v191 = vsel %vm186, %v97, 0
    %193 = vmatprep.subr.mxu0 %v95
    %194 = vmatpush1.msra.mxu0 %v94
    %195 = vmatprep.subr.mxu0 %v191
    %196 = vmatpush1.msra.mxu0 %v188
    %197 = vmatprep.subr.mxu0 0.0
    %198 = vmatpush1.msra.mxu0 0.0
    %199 = vmatprep.subr.mxu0 0.0
    %200 = vmatpush1.msra.mxu0 0.0
    %201 = vmatprep.subr.mxu0 0.0
    %202 = vmatpush1.msra.mxu0 0.0
    %203 = vmatprep.subr.mxu0 0.0
    %204 = vmatpush1.msra.mxu0 0.0
    %205 = vmatprep.subr.mxu0 0.0
    %206 = vmatpush1.msra.mxu0 0.0
    %207 = vmatprep.subr.mxu0 0.0
    %208 = vmatpush1.msra.mxu0 0.0
    %209 = vmatprep.subr.mxu0 0.0
    %210 = vmatpush1.msra.mxu0 0.0
    %211 = vmatprep.subr.mxu0 0.0
    %212 = vmatpush1.msra.mxu0 0.0
    %213 = vmatprep.subr.mxu0 0.0
    %214 = vmatpush1.msra.mxu0 0.0
    %215 = vmatprep.subr.mxu0 0.0
    %216 = vmatpush1.msra.mxu0 0.0
    %217 = vmatprep.subr.mxu0 0.0
    %218 = vmatpush1.msra.mxu0 0.0
    %219 = vmatprep.subr.mxu0 0.0
    %220 = vmatpush1.msra.mxu0 0.0
    %221 = vmatprep.subr.mxu0 0.0
    %222 = vmatpush1.msra.mxu0 0.0
    %223 = vmatprep.subr.mxu0 0.0
    %224 = vmatpush1.msra.mxu0 0.0
    %225 = vmatprep.subr.mxu0 0.0
    %226 = vmatpush1.msra.mxu0 0.0
    %227 = vmatprep.subr.mxu0 0.0
    %228 = vmatpush1.msra.mxu0 0.0
    %229 = vmatprep.subr.mxu0 0.0
    %230 = vmatpush1.msra.mxu0 0.0
    %231 = vmatprep.subr.mxu0 0.0
    %232 = vmatpush1.msra.mxu0 0.0
    %233 = vmatprep.subr.mxu0 0.0
    %234 = vmatpush1.msra.mxu0 0.0
    %235 = vmatprep.subr.mxu0 0.0
    %236 = vmatpush1.msra.mxu0 0.0
    %237 = vmatprep.subr.mxu0 0.0
    %238 = vmatpush1.msra.mxu0 0.0
    %239 = vmatprep.subr.mxu0 0.0
    %240 = vmatpush1.msra.mxu0 0.0
    %241 = vmatprep.subr.mxu0 0.0
    %242 = vmatpush1.msra.mxu0 0.0
    %243 = vmatprep.subr.mxu0 0.0
    %244 = vmatpush1.msra.mxu0 0.0
    %245 = vmatprep.subr.mxu0 0.0
    %246 = vmatpush1.msra.mxu0 0.0
    %247 = vmatprep.subr.mxu0 0.0
    %248 = vmatpush1.msra.mxu0 0.0
    %249 = vmatprep.subr.mxu0 0.0
    %250 = vmatpush1.msra.mxu0 0.0
    %251 = vmatprep.subr.mxu0 0.0
    %252 = vmatpush1.msra.mxu0 0.0
    %253 = vmatprep.subr.mxu0 0.0
    %254 = vmatpush1.msra.mxu0 0.0
    %255 = vmatprep.subr.mxu0 0.0
    %256 = vmatpush1.msra.mxu0 0.0
    %257 = vmatprep.mubr.f32.mxu0 0.0
    %258 = vmatmul.mubr.f32.gmra.mrb[0].mxu0 %v184
    %v259 = vpop.f32.mrb[0].mxu0
    %v260 = vadd.f32 %v178, %v259
    %v261 = vpop.f32.mrb[0].mxu0
    %v262 = vadd.f32 %v180, %v261
    %263 = vdwg.mxu0
    %v264 = vld [vmem:[%s4] sm:$0x3]
    %v266 = vlaneseq
    %v267 = vshrl.u32 %v266, 7
    %v268 = vsub.s32 0, %v267
    %v269 = vrot.slane %v264, %v268
    %v270 = vlaneseq
    %v271 = vshrl.u32 %v270, 7
    %v272 = vsub.s32 1, %v271
    %v273 = vrot.slane %v264, %v272
    %v276 = vadd.f32 %v260, %v269
    %v277 = vadd.f32 %v262, %v273
    %v278 = vmax.f32 %v276, 0.0
    %v279 = vmax.f32 %v277, 0.0
    %v280 = vld [vmem:[#allocation4] sm:$0xff]
    %v281 = vld [vmem:[#allocation4 + $0x8] sm:$0xff]
    %v282 = vld [vmem:[#allocation4 + $0x10] sm:$0xff]
    %v283 = vld [vmem:[#allocation4 + $0x18] sm:$0xff]
    %v284 = vld [vmem:[#allocation4 + $0x20] sm:$0xff]
    %v285 = vld [vmem:[#allocation4 + $0x28] sm:$0xff]
    %v286 = vld [vmem:[#allocation4 + $0x30] sm:$0xff]
    %v287 = vld [vmem:[#allocation4 + $0x38] sm:$0xff]
    %v288 = vld [vmem:[#allocation4 + $0x40] sm:$0xff]
    %v289 = vld [vmem:[#allocation4 + $0x48] sm:$0xff]
    %v290 = vld [vmem:[#allocation4 + $0x50] sm:$0xff]
    %v291 = vld [vmem:[#allocation4 + $0x58] sm:$0xff]
    %v292 = vld [vmem:[#allocation4 + $0x60] sm:$0xff]
    %v293 = vld [vmem:[#allocation4 + $0x68] sm:$0xff]
    %v294 = vld [vmem:[#allocation4 + $0x70] sm:$0xff]
    %v295 = vld [vmem:[#allocation4 + $0x78] sm:$0xff]
    %v296 = vld [vmem:[#allocation4 + $0x80] sm:$0xff]
    %v297 = vld [vmem:[#allocation4 + $0x88] sm:$0xff]
    %v298 = vld [vmem:[#allocation4 + $0x90] sm:$0xff]
    %v299 = vld [vmem:[#allocation4 + $0x98] sm:$0xff]
    %v300 = vld [vmem:[#allocation4 + $0xa0] sm:$0xff]
    %v301 = vld [vmem:[#allocation4 + $0xa8] sm:$0xff]
    %v302 = vld [vmem:[#allocation4 + $0xb0] sm:$0xff]
    %v303 = vld [vmem:[#allocation4 + $0xb8] sm:$0xff]
    %v304 = vld [vmem:[#allocation4 + $0xc0] sm:$0xff]
    %v305 = vld [vmem:[#allocation4 + $0xc8] sm:$0xff]
    %v306 = vld [vmem:[#allocation4 + $0xd0] sm:$0xff]
    %v307 = vld [vmem:[#allocation4 + $0xd8] sm:$0xff]
    %v308 = vld [vmem:[#allocation4 + $0xe0] sm:$0xff]
    %v309 = vld [vmem:[#allocation4 + $0xe8] sm:$0xff]
    %v310 = vld [vmem:[#allocation4 + $0xf0] sm:$0xff]
    %v311 = vld [vmem:[#allocation4 + $0xf8] sm:$0xff]
    %v312 = vld [vmem:[#allocation4 + $0x100] sm:$0xff]
    %v313 = vld [vmem:[#allocation4 + $0x108] sm:$0xff]
    %v314 = vld [vmem:[#allocation4 + $0x110] sm:$0xff]
    %v315 = vld [vmem:[#allocation4 + $0x118] sm:$0xff]
    %v316 = vld [vmem:[#allocation4 + $0x120] sm:$0xff]
    %v317 = vld [vmem:[#allocation4 + $0x128] sm:$0xff]
    %v318 = vld [vmem:[#allocation4 + $0x130] sm:$0xff]
    %v319 = vld [vmem:[#allocation4 + $0x138] sm:$0xff]
    %v320 = vld [vmem:[#allocation4 + $0x140] sm:$0xff]
    %v321 = vld [vmem:[#allocation4 + $0x148] sm:$0xff]
    %v322 = vld [vmem:[#allocation4 + $0x150] sm:$0xff]
    %v323 = vld [vmem:[#allocation4 + $0x158] sm:$0xff]
    %v324 = vld [vmem:[#allocation4 + $0x160] sm:$0xff]
    %v325 = vld [vmem:[#allocation4 + $0x168] sm:$0xff]
    %v326 = vld [vmem:[#allocation4 + $0x170] sm:$0xff]
    %v327 = vld [vmem:[#allocation4 + $0x178] sm:$0xff]
    %v328 = vld [vmem:[#allocation4 + $0x180] sm:$0xff]
    %v329 = vld [vmem:[#allocation4 + $0x188] sm:$0xff]
    %v330 = vld [vmem:[#allocation4 + $0x190] sm:$0xff]
    %v331 = vld [vmem:[#allocation4 + $0x198] sm:$0xff]
    %v332 = vld [vmem:[#allocation4 + $0x1a0] sm:$0xff]
    %v333 = vld [vmem:[#allocation4 + $0x1a8] sm:$0xff]
    %v334 = vld [vmem:[#allocation4 + $0x1b0] sm:$0xff]
    %v335 = vld [vmem:[#allocation4 + $0x1b8] sm:$0xff]
    %v336 = vld [vmem:[#allocation4 + $0x1c0] sm:$0xff]
    %v337 = vld [vmem:[#allocation4 + $0x1c8] sm:$0xff]
    %v338 = vld [vmem:[#allocation4 + $0x1d0] sm:$0xff]
    %v339 = vld [vmem:[#allocation4 + $0x1d8] sm:$0xff]
    %v340 = vld [vmem:[#allocation4 + $0x1e0] sm:$0xff]
    %v341 = vld [vmem:[#allocation4 + $0x1e8] sm:$0xff]
    %v342 = vld [vmem:[#allocation4 + $0x1f0] sm:$0xff]
    %v343 = vld [vmem:[#allocation4 + $0x1f8] sm:$0xff]
    %v344 = vld [vmem:[%s6] sm:$0x3]
    %v346 = vlaneseq
    %v347 = vshrl.u32 %v346, 7
    %v348 = vsub.s32 0, %v347
    %v349 = vrot.slane %v344, %v348
    %v350 = vlaneseq
    %v351 = vshrl.u32 %v350, 7
    %v352 = vsub.s32 1, %v351
    %v353 = vrot.slane %v344, %v352
    %356 = vmatprep.subr.mxu0 %v281
    %357 = vmatpush1.msra.mxu0 %v280
    %358 = vmatprep.subr.mxu0 %v283
    %359 = vmatpush1.msra.mxu0 %v282
    %360 = vmatprep.subr.mxu0 %v285
    %361 = vmatpush1.msra.mxu0 %v284
    %362 = vmatprep.subr.mxu0 %v287
    %363 = vmatpush1.msra.mxu0 %v286
    %364 = vmatprep.subr.mxu0 %v289
    %365 = vmatpush1.msra.mxu0 %v288
    %366 = vmatprep.subr.mxu0 %v291
    %367 = vmatpush1.msra.mxu0 %v290
    %368 = vmatprep.subr.mxu0 %v293
    %369 = vmatpush1.msra.mxu0 %v292
    %370 = vmatprep.subr.mxu0 %v295
    %371 = vmatpush1.msra.mxu0 %v294
    %372 = vmatprep.subr.mxu0 %v297
    %373 = vmatpush1.msra.mxu0 %v296
    %374 = vmatprep.subr.mxu0 %v299
    %375 = vmatpush1.msra.mxu0 %v298
    %376 = vmatprep.subr.mxu0 %v301
    %377 = vmatpush1.msra.mxu0 %v300
    %378 = vmatprep.subr.mxu0 %v303
    %379 = vmatpush1.msra.mxu0 %v302
    %380 = vmatprep.subr.mxu0 %v305
    %381 = vmatpush1.msra.mxu0 %v304
    %382 = vmatprep.subr.mxu0 %v307
    %383 = vmatpush1.msra.mxu0 %v306
    %384 = vmatprep.subr.mxu0 %v309
    %385 = vmatpush1.msra.mxu0 %v308
    %386 = vmatprep.subr.mxu0 %v311
    %387 = vmatpush1.msra.mxu0 %v310
    %388 = vmatprep.subr.mxu0 %v313
    %389 = vmatpush1.msra.mxu0 %v312
    %390 = vmatprep.subr.mxu0 %v315
    %391 = vmatpush1.msra.mxu0 %v314
    %392 = vmatprep.subr.mxu0 %v317
    %393 = vmatpush1.msra.mxu0 %v316
    %394 = vmatprep.subr.mxu0 %v319
    %395 = vmatpush1.msra.mxu0 %v318
    %396 = vmatprep.subr.mxu0 %v321
    %397 = vmatpush1.msra.mxu0 %v320
    %398 = vmatprep.subr.mxu0 %v323
    %399 = vmatpush1.msra.mxu0 %v322
    %400 = vmatprep.subr.mxu0 %v325
    %401 = vmatpush1.msra.mxu0 %v324
    %402 = vmatprep.subr.mxu0 %v327
    %403 = vmatpush1.msra.mxu0 %v326
    %404 = vmatprep.subr.mxu0 %v329
    %405 = vmatpush1.msra.mxu0 %v328
    %406 = vmatprep.subr.mxu0 %v331
    %407 = vmatpush1.msra.mxu0 %v330
    %408 = vmatprep.subr.mxu0 %v333
    %409 = vmatpush1.msra.mxu0 %v332
    %410 = vmatprep.subr.mxu0 %v335
    %411 = vmatpush1.msra.mxu0 %v334
    %412 = vmatprep.subr.mxu0 %v337
    %413 = vmatpush1.msra.mxu0 %v336
    %414 = vmatprep.subr.mxu0 %v339
    %415 = vmatpush1.msra.mxu0 %v338
    %416 = vmatprep.subr.mxu0 %v341
    %417 = vmatpush1.msra.mxu0 %v340
    %418 = vmatprep.subr.mxu0 %v343
    %419 = vmatpush1.msra.mxu0 %v342
    %420 = vmatprep.mubr.f32.mxu0 %v279
    %421 = vmatmul.mubr.f32.gmra.mrb[0].mxu0 %v278
    %v422 = vpop.f32.mrb[0].mxu0
    %v423 = vadd.f32 %v349, %v422
    %v424 = vpop.f32.mrb[0].mxu0
    %v425 = vadd.f32 %v353, %v424
    %426 = vdwg.mxu0
    %v427 = vmax.f32 %v423, 0.0
    %v428 = vmax.f32 %v425, 0.0
    %v429 = vld [vmem:[#allocation6] sm:$0xff]
    %v430 = vld [vmem:[#allocation6 + $0x8] sm:$0xff]
    %v431 = vld [vmem:[#allocation6 + $0x10] sm:$0xff]
    %v432 = vld [vmem:[#allocation6 + $0x18] sm:$0xff]
    %v433 = vld [vmem:[#allocation6 + $0x20] sm:$0xff]
    %v434 = vld [vmem:[#allocation6 + $0x28] sm:$0xff]
    %v435 = vld [vmem:[#allocation6 + $0x30] sm:$0xff]
    %v436 = vld [vmem:[#allocation6 + $0x38] sm:$0xff]
    %v437 = vld [vmem:[#allocation6 + $0x40] sm:$0xff]
    %v438 = vld [vmem:[#allocation6 + $0x48] sm:$0xff]
    %v439 = vld [vmem:[#allocation6 + $0x50] sm:$0xff]
    %v440 = vld [vmem:[#allocation6 + $0x58] sm:$0xff]
    %v441 = vld [vmem:[#allocation6 + $0x60] sm:$0xff]
    %v442 = vld [vmem:[#allocation6 + $0x68] sm:$0xff]
    %v443 = vld [vmem:[#allocation6 + $0x70] sm:$0xff]
    %v444 = vld [vmem:[#allocation6 + $0x78] sm:$0xff]
    %v445 = vld [vmem:[#allocation6 + $0x80] sm:$0xff]
    %v446 = vld [vmem:[#allocation6 + $0x88] sm:$0xff]
    %v447 = vld [vmem:[#allocation6 + $0x90] sm:$0xff]
    %v448 = vld [vmem:[#allocation6 + $0x98] sm:$0xff]
    %v449 = vld [vmem:[#allocation6 + $0xa0] sm:$0xff]
    %v450 = vld [vmem:[#allocation6 + $0xa8] sm:$0xff]
    %v451 = vld [vmem:[#allocation6 + $0xb0] sm:$0xff]
    %v452 = vld [vmem:[#allocation6 + $0xb8] sm:$0xff]
    %v453 = vld [vmem:[#allocation6 + $0xc0] sm:$0xff]
    %v454 = vld [vmem:[#allocation6 + $0xc8] sm:$0xff]
    %v455 = vld [vmem:[#allocation6 + $0xd0] sm:$0xff]
    %v456 = vld [vmem:[#allocation6 + $0xd8] sm:$0xff]
    %v457 = vld [vmem:[#allocation6 + $0xe0] sm:$0xff]
    %v458 = vld [vmem:[#allocation6 + $0xe8] sm:$0xff]
    %v459 = vld [vmem:[#allocation6 + $0xf0] sm:$0xff]
    %v460 = vld [vmem:[#allocation6 + $0xf8] sm:$0xff]
    %v461 = vld [vmem:[#allocation6 + $0x100] sm:$0xff]
    %v462 = vld [vmem:[#allocation6 + $0x108] sm:$0xff]
    %v463 = vld [vmem:[#allocation6 + $0x110] sm:$0xff]
    %v464 = vld [vmem:[#allocation6 + $0x118] sm:$0xff]
    %v465 = vld [vmem:[#allocation6 + $0x120] sm:$0xff]
    %v466 = vld [vmem:[#allocation6 + $0x128] sm:$0xff]
    %v467 = vld [vmem:[#allocation6 + $0x130] sm:$0xff]
    %v468 = vld [vmem:[#allocation6 + $0x138] sm:$0xff]
    %v469 = vld [vmem:[#allocation6 + $0x140] sm:$0xff]
    %v470 = vld [vmem:[#allocation6 + $0x148] sm:$0xff]
    %v471 = vld [vmem:[#allocation6 + $0x150] sm:$0xff]
    %v472 = vld [vmem:[#allocation6 + $0x158] sm:$0xff]
    %v473 = vld [vmem:[#allocation6 + $0x160] sm:$0xff]
    %v474 = vld [vmem:[#allocation6 + $0x168] sm:$0xff]
    %v475 = vld [vmem:[#allocation6 + $0x170] sm:$0xff]
    %v476 = vld [vmem:[#allocation6 + $0x178] sm:$0xff]
    %v477 = vld [vmem:[#allocation6 + $0x180] sm:$0xff]
    %v478 = vld [vmem:[#allocation6 + $0x188] sm:$0xff]
    %v479 = vld [vmem:[#allocation6 + $0x190] sm:$0xff]
    %v480 = vld [vmem:[#allocation6 + $0x198] sm:$0xff]
    %v481 = vld [vmem:[#allocation6 + $0x1a0] sm:$0xff]
    %v482 = vld [vmem:[#allocation6 + $0x1a8] sm:$0xff]
    %v483 = vld [vmem:[#allocation6 + $0x1b0] sm:$0xff]
    %v484 = vld [vmem:[#allocation6 + $0x1b8] sm:$0xff]
    %v485 = vld [vmem:[#allocation6 + $0x1c0] sm:$0xff]
    %v486 = vld [vmem:[#allocation6 + $0x1c8] sm:$0xff]
    %v487 = vld [vmem:[#allocation6 + $0x1d0] sm:$0xff]
    %v488 = vld [vmem:[#allocation6 + $0x1d8] sm:$0xff]
    %v489 = vld [vmem:[#allocation6 + $0x1e0] sm:$0xff]
    %v490 = vld [vmem:[#allocation6 + $0x1e8] sm:$0xff]
    %v491 = vld [vmem:[#allocation6 + $0x1f0] sm:$0xff]
    %v492 = vld [vmem:[#allocation6 + $0x1f8] sm:$0xff]
    %v493 = vld [vmem:[%s8] sm:$0x3]
    %v495 = vlaneseq
    %v496 = vshrl.u32 %v495, 7
    %v497 = vsub.s32 0, %v496
    %v498 = vrot.slane %v493, %v497
    %v499 = vlaneseq
    %v500 = vshrl.u32 %v499, 7
    %v501 = vsub.s32 1, %v500
    %v502 = vrot.slane %v493, %v501
    %505 = vmatprep.subr.mxu0 %v430
    %506 = vmatpush1.msra.mxu0 %v429
    %507 = vmatprep.subr.mxu0 %v432
    %508 = vmatpush1.msra.mxu0 %v431
    %509 = vmatprep.subr.mxu0 %v434
    %510 = vmatpush1.msra.mxu0 %v433
    %511 = vmatprep.subr.mxu0 %v436
    %512 = vmatpush1.msra.mxu0 %v435
    %513 = vmatprep.subr.mxu0 %v438
    %514 = vmatpush1.msra.mxu0 %v437
    %515 = vmatprep.subr.mxu0 %v440
    %516 = vmatpush1.msra.mxu0 %v439
    %517 = vmatprep.subr.mxu0 %v442
    %518 = vmatpush1.msra.mxu0 %v441
    %519 = vmatprep.subr.mxu0 %v444
    %520 = vmatpush1.msra.mxu0 %v443
    %521 = vmatprep.subr.mxu0 %v446
    %522 = vmatpush1.msra.mxu0 %v445
    %523 = vmatprep.subr.mxu0 %v448
    %524 = vmatpush1.msra.mxu0 %v447
    %525 = vmatprep.subr.mxu0 %v450
    %526 = vmatpush1.msra.mxu0 %v449
    %527 = vmatprep.subr.mxu0 %v452
    %528 = vmatpush1.msra.mxu0 %v451
    %529 = vmatprep.subr.mxu0 %v454
    %530 = vmatpush1.msra.mxu0 %v453
    %531 = vmatprep.subr.mxu0 %v456
    %532 = vmatpush1.msra.mxu0 %v455
    %533 = vmatprep.subr.mxu0 %v458
    %534 = vmatpush1.msra.mxu0 %v457
    %535 = vmatprep.subr.mxu0 %v460
    %536 = vmatpush1.msra.mxu0 %v459
    %537 = vmatprep.subr.mxu0 %v462
    %538 = vmatpush1.msra.mxu0 %v461
    %539 = vmatprep.subr.mxu0 %v464
    %540 = vmatpush1.msra.mxu0 %v463
    %541 = vmatprep.subr.mxu0 %v466
    %542 = vmatpush1.msra.mxu0 %v465
    %543 = vmatprep.subr.mxu0 %v468
    %544 = vmatpush1.msra.mxu0 %v467
    %545 = vmatprep.subr.mxu0 %v470
    %546 = vmatpush1.msra.mxu0 %v469
    %547 = vmatprep.subr.mxu0 %v472
    %548 = vmatpush1.msra.mxu0 %v471
    %549 = vmatprep.subr.mxu0 %v474
    %550 = vmatpush1.msra.mxu0 %v473
    %551 = vmatprep.subr.mxu0 %v476
    %552 = vmatpush1.msra.mxu0 %v475
    %553 = vmatprep.subr.mxu0 %v478
    %554 = vmatpush1.msra.mxu0 %v477
    %555 = vmatprep.subr.mxu0 %v480
    %556 = vmatpush1.msra.mxu0 %v479
    %557 = vmatprep.subr.mxu0 %v482
    %558 = vmatpush1.msra.mxu0 %v481
    %559 = vmatprep.subr.mxu0 %v484
    %560 = vmatpush1.msra.mxu0 %v483
    %561 = vmatprep.subr.mxu0 %v486
    %562 = vmatpush1.msra.mxu0 %v485
    %563 = vmatprep.subr.mxu0 %v488
    %564 = vmatpush1.msra.mxu0 %v487
    %565 = vmatprep.subr.mxu0 %v490
    %566 = vmatpush1.msra.mxu0 %v489
    %567 = vmatprep.subr.mxu0 %v492
    %568 = vmatpush1.msra.mxu0 %v491
    %569 = vmatprep.mubr.f32.mxu0 %v428
    %570 = vmatmul.mubr.f32.gmra.mrb[0].mxu0 %v427
    %v571 = vpop.f32.mrb[0].mxu0
    %v572 = vadd.f32 %v498, %v571
    %v573 = vpop.f32.mrb[0].mxu0
    %v574 = vadd.f32 %v502, %v573
    %575 = vdwg.mxu0
    %v576 = vmax.f32 %v572, 0.0
    %v577 = vmax.f32 %v574, 0.0
    %v578 = vld [vmem:[#allocation7] sm:$0xff]
    %v579 = vld [vmem:[#allocation7 + $0x8] sm:$0xff]
    %v580 = vld [vmem:[#allocation7 + $0x10] sm:$0xff]
    %v581 = vld [vmem:[#allocation7 + $0x18] sm:$0xff]
    %v582 = vld [vmem:[#allocation7 + $0x20] sm:$0xff]
    %v583 = vld [vmem:[#allocation7 + $0x28] sm:$0xff]
    %v584 = vld [vmem:[#allocation7 + $0x30] sm:$0xff]
    %v585 = vld [vmem:[#allocation7 + $0x38] sm:$0xff]
    %v586 = vld [vmem:[#allocation7 + $0x40] sm:$0xff]
    %v587 = vld [vmem:[#allocation7 + $0x48] sm:$0xff]
    %v588 = vld [vmem:[#allocation7 + $0x50] sm:$0xff]
    %v589 = vld [vmem:[#allocation7 + $0x58] sm:$0xff]
    %v590 = vld [vmem:[#allocation7 + $0x60] sm:$0xff]
    %v591 = vld [vmem:[#allocation7 + $0x68] sm:$0xff]
    %v592 = vld [vmem:[#allocation7 + $0x70] sm:$0xff]
    %v593 = vld [vmem:[#allocation7 + $0x78] sm:$0xff]
    %v594 = vld [vmem:[#allocation7 + $0x80] sm:$0xff]
    %v595 = vld [vmem:[#allocation7 + $0x88] sm:$0xff]
    %v596 = vld [vmem:[#allocation7 + $0x90] sm:$0xff]
    %v597 = vld [vmem:[#allocation7 + $0x98] sm:$0xff]
    %v598 = vld [vmem:[#allocation7 + $0xa0] sm:$0xff]
    %v599 = vld [vmem:[#allocation7 + $0xa8] sm:$0xff]
    %v600 = vld [vmem:[#allocation7 + $0xb0] sm:$0xff]
    %v601 = vld [vmem:[#allocation7 + $0xb8] sm:$0xff]
    %v602 = vld [vmem:[#allocation7 + $0xc0] sm:$0xff]
    %v603 = vld [vmem:[#allocation7 + $0xc8] sm:$0xff]
    %v604 = vld [vmem:[#allocation7 + $0xd0] sm:$0xff]
    %v605 = vld [vmem:[#allocation7 + $0xd8] sm:$0xff]
    %v606 = vld [vmem:[#allocation7 + $0xe0] sm:$0xff]
    %v607 = vld [vmem:[#allocation7 + $0xe8] sm:$0xff]
    %v608 = vld [vmem:[#allocation7 + $0xf0] sm:$0xff]
    %v609 = vld [vmem:[#allocation7 + $0xf8] sm:$0xff]
    %v610 = vld [vmem:[%s10] sm:$0x1]
    %v612 = vlaneseq
    %v613 = vshrl.u32 %v612, 7
    %v614 = vsub.s32 0, %v613
    %v615 = vrot.slane %v610, %v614
    %617 = vmatprep.subr.mxu0 0.0
    %618 = vmatpush1.msra.mxu0 %v578
    %619 = vmatprep.subr.mxu0 0.0
    %620 = vmatpush1.msra.mxu0 %v579
    %621 = vmatprep.subr.mxu0 0.0
    %622 = vmatpush1.msra.mxu0 %v580
    %623 = vmatprep.subr.mxu0 0.0
    %624 = vmatpush1.msra.mxu0 %v581
    %625 = vmatprep.subr.mxu0 0.0
    %626 = vmatpush1.msra.mxu0 %v582
    %627 = vmatprep.subr.mxu0 0.0
    %628 = vmatpush1.msra.mxu0 %v583
    %629 = vmatprep.subr.mxu0 0.0
    %630 = vmatpush1.msra.mxu0 %v584
    %631 = vmatprep.subr.mxu0 0.0
    %632 = vmatpush1.msra.mxu0 %v585
    %633 = vmatprep.subr.mxu0 0.0
    %634 = vmatpush1.msra.mxu0 %v586
    %635 = vmatprep.subr.mxu0 0.0
    %636 = vmatpush1.msra.mxu0 %v587
    %637 = vmatprep.subr.mxu0 0.0
    %638 = vmatpush1.msra.mxu0 %v588
    %639 = vmatprep.subr.mxu0 0.0
    %640 = vmatpush1.msra.mxu0 %v589
    %641 = vmatprep.subr.mxu0 0.0
    %642 = vmatpush1.msra.mxu0 %v590
    %643 = vmatprep.subr.mxu0 0.0
    %644 = vmatpush1.msra.mxu0 %v591
    %645 = vmatprep.subr.mxu0 0.0
    %646 = vmatpush1.msra.mxu0 %v592
    %647 = vmatprep.subr.mxu0 0.0
    %648 = vmatpush1.msra.mxu0 %v593
    %649 = vmatprep.subr.mxu0 0.0
    %650 = vmatpush1.msra.mxu0 %v594
    %651 = vmatprep.subr.mxu0 0.0
    %652 = vmatpush1.msra.mxu0 %v595
    %653 = vmatprep.subr.mxu0 0.0
    %654 = vmatpush1.msra.mxu0 %v596
    %655 = vmatprep.subr.mxu0 0.0
    %656 = vmatpush1.msra.mxu0 %v597
    %657 = vmatprep.subr.mxu0 0.0
    %658 = vmatpush1.msra.mxu0 %v598
    %659 = vmatprep.subr.mxu0 0.0
    %660 = vmatpush1.msra.mxu0 %v599
    %661 = vmatprep.subr.mxu0 0.0
    %662 = vmatpush1.msra.mxu0 %v600
    %663 = vmatprep.subr.mxu0 0.0
    %664 = vmatpush1.msra.mxu0 %v601
    %665 = vmatprep.subr.mxu0 0.0
    %666 = vmatpush1.msra.mxu0 %v602
    %667 = vmatprep.subr.mxu0 0.0
    %668 = vmatpush1.msra.mxu0 %v603
    %669 = vmatprep.subr.mxu0 0.0
    %670 = vmatpush1.msra.mxu0 %v604
    %671 = vmatprep.subr.mxu0 0.0
    %672 = vmatpush1.msra.mxu0 %v605
    %673 = vmatprep.subr.mxu0 0.0
    %674 = vmatpush1.msra.mxu0 %v606
    %675 = vmatprep.subr.mxu0 0.0
    %676 = vmatpush1.msra.mxu0 %v607
    %677 = vmatprep.subr.mxu0 0.0
    %678 = vmatpush1.msra.mxu0 %v608
    %679 = vmatprep.subr.mxu0 0.0
    %680 = vmatpush1.msra.mxu0 %v609
    %681 = vmatprep.mubr.f32.mxu0 %v577
    %682 = vmatmul.mubr.f32.gmra.mrb[0].mxu0 %v576
    %v683 = vpop.f32.mrb[0].mxu0
    %v684 = vadd.f32 %v615, %v683
    %v685 = vpop.f32.mrb[0].mxu0
    %686 = vdwg.mxu0
    %v687 = vmax.f32 %v684, 0.0
    %v688 = vand.u32 2147483647, %v684
    %v689 = vsub.f32 0.0, %v688
    %v690 = vmul.f32 %v689, 1.442695
    %v691 = vpow.pop %v690
    %v692 = vadd.f32 %v691, 1.0
    %v693 = vlog2.pop %v692
    %v694 = vmul.f32 %v693, 0.6931472
    %v695 = vmul.f32 -0.5, %v691
    %v696 = vadd.f32 %v695, 1.0
    %v697 = vmul.f32 %v696, %v691
    %v698 = vand.u32 2147483647, %v691
    %vm699 = vcmp.lt.f32.partialorder %v698, 0.0004427343
    %v700 = vsel %vm699, %v697, %v694
    %v701 = vadd.f32 %v687, %v700
    %v702 = vadd.f32 %v701, 1e-06
    %v703 = vlaneseq
    %v704 = vand.u32 %v703, 127
    %vm705 = vcmp.eq.s32.totalorder %v704, 1
    %v706 = vsel %vm705, %v702, %v684
    %707 = vst [vmem:[%s11] sm:$0xff] %v706
    // Predicated region
    $region62: #{gaussian_critic_forward.1} parent=1 // pred_check
      _
    $region63: #{gaussian_critic_forward.1} parent=1 // pred_check_branch
      %709 = sbr.rel (0) target = $region65
    $region64: #{gaussian_critic_forward.1} parent=1 // pred_region
      _
    $region65: #{gaussian_critic_forward.1} parent=1 // pred_fallthru
      _
    // Predicated region
    $region66: #{gaussian_critic_forward.1} parent=1 // pred_check
      _
    $region67: #{gaussian_critic_forward.1} parent=1 // pred_check_branch
      %711 = sbr.rel (0) target = $region69
    $region68: #{gaussian_critic_forward.1} parent=1 // pred_region
      _
    $region69: #{gaussian_critic_forward.1} parent=1 // pred_fallthru
      _
    %712 = vsyncpa [#allocation3], 1
    %713 = vsyncpa [#allocation5], 1
    %714 = vsyncpa [#allocation8], 1

</llo_original>
